<compile_context>
chip_gen: v7x
topology: tpu7x:2x2x1
jax: 0.10.0
libtpu: 0.0.40
codegen_flags: <defaults>
</compile_context>

<pallas_src>
import functools

import jax
import jax.numpy as jnp
from jax import lax
from jax.experimental import pallas as pl
from jax.experimental.pallas import tpu as pltpu


def _cbam_kernel(x_ref, cw_ref, cb_ref, sw_ref, sb_ref, o_ref,
                 *, c_kernel, s_kernel):
    f32 = jnp.float32
    x = x_ref[...]                                        # (Bt, C, L), native dtype
    Bt, C, L = x.shape
    cp = c_kernel // 2
    sp = s_kernel // 2

    # ---- ChannelGate: mean over L -> 1->1 conv along C ("same" zero pad) -> sigmoid
    m = jnp.mean(x, axis=2, dtype=f32)                    # (Bt, C), lane-major
    cidx = lax.broadcasted_iota(jnp.int32, (1, C), 1)     # lane index along C
    ch = jnp.full((Bt, C), cb_ref[0], f32)                # bias init, no zero+add
    for j in range(c_kernel):                             # static unroll over taps
        d = j - cp                                        # tap offset along C
        if d == 0:
            ch = ch + cw_ref[j] * m
        else:
            # shifted[c] = m[c + d]; circular roll on the XLU, then zero the
            # wrapped lanes to realize "same" zero padding.
            rm = pltpu.roll(m, shift=(-d) % C, axis=1)
            valid = (cidx >= -d) & (cidx < C - d)
            ch = ch + jnp.where(valid, cw_ref[j] * rm, 0.0)
    ch_mask = jax.nn.sigmoid(ch)                          # (Bt, C) f32
    x1 = x * ch_mask[:, :, None].astype(x.dtype)          # channel-attended features

    # ---- SpatialGate: mean & max over C -> 2->1 conv along L ("same") -> sigmoid
    avg = jnp.mean(x1, axis=1, dtype=f32)                 # (Bt, L)
    mx = jnp.max(x1, axis=1).astype(f32)                  # (Bt, L)
    lidx = lax.broadcasted_iota(jnp.int32, (1, L), 1)     # lane index along L
    s = jnp.full((Bt, L), sb_ref[0], f32)
    for j in range(s_kernel):                             # static unroll over taps
        d = j - sp                                        # tap offset along L
        if d == 0:
            s = s + sw_ref[0, j] * avg + sw_ref[1, j] * mx
        else:
            ra = pltpu.roll(avg, shift=(-d) % L, axis=1)
            rm = pltpu.roll(mx, shift=(-d) % L, axis=1)
            valid = (lidx >= -d) & (lidx < L - d)
            s = s + jnp.where(valid, sw_ref[0, j] * ra + sw_ref[1, j] * rm, 0.0)
    s_mask = jax.nn.sigmoid(s)                            # (Bt, L) f32

    o_ref[...] = (x1 * s_mask[:, None, :].astype(x.dtype)).astype(o_ref.dtype)


def _pick_tiling(B, C, L, itemsize):
    """Generation-aware (Bt, grid_steps, vmem_limit_bytes)."""
    kind = ""
    try:
        kind = jax.devices()[0].device_kind.lower()
    except Exception:
        pass
    is_v7 = "v7" in kind
    # v7x: 2 TensorCores/chip but only 64 MiB VMEM per TC -> smaller slabs and
    # >= 2 grid steps per core so DMA prefetch/writeback overlaps compute.
    # v5e/v6e: a single TC and 128 MiB VMEM -> big slabs, no artificial split.
    target_bytes = (4 << 20) if is_v7 else (8 << 20)
    vmem_cap = (48 << 20) if is_v7 else (100 << 20)

    per_batch = max(1, C * L * itemsize)
    cap = max(1, target_bytes // per_batch)
    if is_v7 and B >= 2:
        cap = min(cap, max(1, B // min(B, 4)))            # >= 2 steps/core when B allows
    bt = int(min(B, cap))
    grid_steps = pl.cdiv(B, bt)                           # non-divisor B -> padded tail
    block_bytes = bt * per_batch
    # Working set ~ 2x in + 2x out (double-buffered) + x1 copy + small 2D scratch.
    vmem_bytes = int(min(vmem_cap, max(24 << 20, 6 * block_bytes + (4 << 20))))
    return bt, grid_steps, vmem_bytes


def cbam_pallas(x, cw, cb, sw, sb):
    """x: (B, C, L); cw: (c_kernel,); cb: (1,); sw: (2, s_kernel); sb: (1,).

    L should preferably be a multiple of 128 (lane-dense stores); C a multiple
    of the dtype sublane (8 for f32, 16 for bf16).
    """
    B, C, L = x.shape
    c_kernel = int(cw.shape[0])
    s_kernel = int(sw.shape[1])
    assert c_kernel % 2 == 1 and s_kernel % 2 == 1, "'same' padding assumes odd kernels"
    assert c_kernel // 2 < C and s_kernel // 2 < L, "kernel half-width must fit its axis"
    # TODO(synk): no L-tiling fallback — a single (Bt=1, C, L) plane must fit VMEM.

    itemsize = jnp.dtype(x.dtype).itemsize
    bt, grid_steps, vmem_bytes = _pick_tiling(B, C, L, itemsize)

    kernel = functools.partial(_cbam_kernel, c_kernel=c_kernel, s_kernel=s_kernel)
    return pl.pallas_call(
        kernel,
        out_shape=jax.ShapeDtypeStruct((B, C, L), x.dtype),
        grid=(grid_steps,),
        in_specs=[
            pl.BlockSpec((bt, C, L), lambda b: (b, 0, 0)),          # x slab in VMEM
            pl.BlockSpec(memory_space=pltpu.MemorySpace.SMEM),      # channel conv weight
            pl.BlockSpec(memory_space=pltpu.MemorySpace.SMEM),      # channel conv bias
            pl.BlockSpec(memory_space=pltpu.MemorySpace.SMEM),      # spatial conv weight
            pl.BlockSpec(memory_space=pltpu.MemorySpace.SMEM),      # spatial conv bias
        ],
        out_specs=pl.BlockSpec((bt, C, L), lambda b: (b, 0, 0)),
        compiler_params=pltpu.CompilerParams(
            dimension_semantics=("parallel",),
            vmem_limit_bytes=vmem_bytes,
        ),
    )(x, cw, cb, sw, sb)


def cbam_ref(x, cw, cb, sw, sb):
    """Pure-JAX reference reproducing the PyTorch CBAM forward exactly."""
    ck, cp = cw.shape[0], cw.shape[0] // 2
    sk, sp = sw.shape[1], sw.shape[1] // 2
    dn = ("NCH", "OIH", "NCH")
    # ChannelGate
    m = jnp.mean(x, axis=2, keepdims=True)                       # (B, C, 1)
    mt = jnp.transpose(m, (0, 2, 1))                             # (B, 1, C)
    ch = jax.lax.conv_general_dilated(mt, cw.reshape(1, 1, ck), (1,), [(cp, cp)],
                                      dimension_numbers=dn) + cb.reshape(1, 1, 1)
    ch = jnp.transpose(ch, (0, 2, 1))                            # (B, C, 1)
    x1 = jax.nn.sigmoid(ch) * x
    # SpatialGate
    avg = jnp.mean(x1, axis=1, keepdims=True)
    mx = jnp.max(x1, axis=1, keepdims=True)
    cat = jnp.concatenate([avg, mx], axis=1)                     # (B, 2, L)
    s = jax.lax.conv_general_dilated(cat, sw.reshape(1, 2, sk), (1,), [(sp, sp)],
                                     dimension_numbers=dn) + sb.reshape(1, 1, 1)
    return jax.nn.sigmoid(s) * x1


if __name__ == "__main__":
    B, C, L = 2, 8, 128
    c_kernel, s_kernel = 3, 7

    key = jax.random.PRNGKey(0)
    kx, kcw, kcb, ksw, ksb = jax.random.split(key, 5)
    x = jax.random.normal(kx, (B, C, L), jnp.float32)
    # ChannelGate: nn.Conv1d(1, 1, c_kernel) -> weight (1,1,ck) flattened to (ck,), bias (1,)
    cw = 0.5 * jax.random.normal(kcw, (c_kernel,), jnp.float32)
    cb = 0.1 * jax.random.normal(kcb, (1,), jnp.float32)
    # SpatialGate: nn.Conv1d(2, 1, s_kernel) -> weight (1,2,sk) as (2, sk), bias (1,)
    sw = 0.5 * jax.random.normal(ksw, (2, s_kernel), jnp.float32)
    sb = 0.1 * jax.random.normal(ksb, (1,), jnp.float32)

    out = jax.block_until_ready(cbam_pallas(x, cw, cb, sw, sb))
    ref = cbam_ref(x, cw, cb, sw, sb)

    assert out.shape == x.shape and out.dtype == x.dtype
    err = float(jnp.max(jnp.abs(out - ref)))
    assert jnp.allclose(out, ref, atol=1e-5, rtol=1e-5), f"max abs err {err}"
    print("KERNEL_OK")
</pallas_src>

<mosaic_0001>
module attributes {stable_mosaic.version = 11 : i64} {
  func.func @_cbam_kernel(%arg0: i32, %arg1: memref<2x8x128xf32, #tpu.memory_space<vmem>>, %arg2: memref<3xf32, #tpu.memory_space<smem>>, %arg3: memref<1xf32, #tpu.memory_space<smem>>, %arg4: memref<2x7xf32, #tpu.memory_space<smem>>, %arg5: memref<1xf32, #tpu.memory_space<smem>>, %arg6: memref<2x8x128xf32, #tpu.memory_space<vmem>>) attributes {dimension_semantics = [#tpu.dimension_semantics<parallel>], iteration_bounds = array<i64: 1>, scalar_prefetch = 0 : i64, scratch_operands = 0 : i64, tpu.core_type = #tpu.core_type<tc>, window_params = [{transform_indices = @transform_0, window_bounds = array<i64: 2, 8, 128>}, {transform_indices = @transform_1, window_bounds = array<i64: 3>}, {transform_indices = @transform_2, window_bounds = array<i64: 1>}, {transform_indices = @transform_3, window_bounds = array<i64: 2, 7>}, {transform_indices = @transform_4, window_bounds = array<i64: 1>}, {transform_indices = @transform_5, window_bounds = array<i64: 2, 8, 128>}]} {
    %c0 = arith.constant 0 : index
    %c0_0 = arith.constant 0 : index
    %c0_1 = arith.constant 0 : index
    %0 = vector.load %arg1[%c0, %c0_0, %c0_1] : memref<2x8x128xf32, #tpu.memory_space<vmem>>, vector<2x8x128xf32>
    %cst = arith.constant dense<0.000000e+00> : vector<2x8xf32>
    %1 = vector.multi_reduction <add>, %0, %cst [2] : vector<2x8x128xf32> to vector<2x8xf32>
    %cst_2 = arith.constant 1.280000e+02 : f32
    %2 = vector.broadcast %cst_2 : f32 to vector<2x8xf32>
    %3 = arith.divf %1, %2 : vector<2x8xf32>
    %4 = tpu.iota {dimensions = array<i32: 1>} : vector<1x8xi32>
    %c0_3 = arith.constant 0 : index
    %5 = memref.load %arg3[%c0_3] : memref<1xf32, #tpu.memory_space<smem>>
    %6 = vector.broadcast %5 : f32 to vector<2x8xf32>
    %c1_i32 = arith.constant 1 : i32
    %7 = tpu.dynamic_rotate %3 by %c1_i32 dim 1 : vector<2x8xf32>, i32 -> vector<2x8xf32>
    %c1_i32_4 = arith.constant 1 : i32
    %8 = vector.broadcast %c1_i32_4 : i32 to vector<1x8xi32>
    %9 = arith.cmpi sge, %4, %8 : vector<1x8xi32>
    %c9_i32 = arith.constant 9 : i32
    %10 = vector.broadcast %c9_i32 : i32 to vector<1x8xi32>
    %11 = arith.cmpi slt, %4, %10 : vector<1x8xi32>
    %12 = arith.andi %9, %11 : vector<1x8xi1>
    %c0_5 = arith.constant 0 : index
    %13 = memref.load %arg2[%c0_5] : memref<3xf32, #tpu.memory_space<smem>>
    %14 = vector.broadcast %13 : f32 to vector<2x8xf32>
    %15 = arith.mulf %14, %7 : vector<2x8xf32>
    %cst_6 = arith.constant 0.000000e+00 : f32
    %16 = vector.shape_cast %12 : vector<1x8xi1> to vector<1x8xi1>
    %17 = vector.broadcast %16 : vector<1x8xi1> to vector<2x8xi1>
    %18 = vector.broadcast %cst_6 : f32 to vector<2x8xf32>
    %19 = arith.select %17, %15, %18 : vector<2x8xi1>, vector<2x8xf32>
    %20 = arith.addf %6, %19 : vector<2x8xf32>
    %c1 = arith.constant 1 : index
    %21 = memref.load %arg2[%c1] : memref<3xf32, #tpu.memory_space<smem>>
    %22 = vector.broadcast %21 : f32 to vector<2x8xf32>
    %23 = arith.mulf %22, %3 : vector<2x8xf32>
    %24 = arith.addf %20, %23 : vector<2x8xf32>
    %c7_i32 = arith.constant 7 : i32
    %25 = tpu.dynamic_rotate %3 by %c7_i32 dim 1 : vector<2x8xf32>, i32 -> vector<2x8xf32>
    %c-1_i32 = arith.constant -1 : i32
    %26 = vector.broadcast %c-1_i32 : i32 to vector<1x8xi32>
    %27 = arith.cmpi sge, %4, %26 : vector<1x8xi32>
    %c7_i32_7 = arith.constant 7 : i32
    %28 = vector.broadcast %c7_i32_7 : i32 to vector<1x8xi32>
    %29 = arith.cmpi slt, %4, %28 : vector<1x8xi32>
    %30 = arith.andi %27, %29 : vector<1x8xi1>
    %c2 = arith.constant 2 : index
    %31 = memref.load %arg2[%c2] : memref<3xf32, #tpu.memory_space<smem>>
    %32 = vector.broadcast %31 : f32 to vector<2x8xf32>
    %33 = arith.mulf %32, %25 : vector<2x8xf32>
    %cst_8 = arith.constant 0.000000e+00 : f32
    %34 = vector.shape_cast %30 : vector<1x8xi1> to vector<1x8xi1>
    %35 = vector.broadcast %34 : vector<1x8xi1> to vector<2x8xi1>
    %36 = vector.broadcast %cst_8 : f32 to vector<2x8xf32>
    %37 = arith.select %35, %33, %36 : vector<2x8xi1>, vector<2x8xf32>
    %38 = arith.addf %24, %37 : vector<2x8xf32>
    %39 = arith.negf %38 : vector<2x8xf32>
    %40 = math.exp %39 : vector<2x8xf32>
    %cst_9 = arith.constant 1.000000e+00 : f32
    %41 = vector.broadcast %cst_9 : f32 to vector<2x8xf32>
    %42 = arith.addf %41, %40 : vector<2x8xf32>
    %43 = arith.divf %41, %42 : vector<2x8xf32>
    %44 = vector.shape_cast %43 : vector<2x8xf32> to vector<2x8x1xf32>
    %45 = vector.broadcast %44 : vector<2x8x1xf32> to vector<2x8x128xf32>
    %46 = arith.mulf %0, %45 : vector<2x8x128xf32>
    %cst_10 = arith.constant dense<0.000000e+00> : vector<2x128xf32>
    %47 = vector.multi_reduction <add>, %46, %cst_10 [1] : vector<2x8x128xf32> to vector<2x128xf32>
    %cst_11 = arith.constant 8.000000e+00 : f32
    %48 = vector.broadcast %cst_11 : f32 to vector<2x128xf32>
    %49 = arith.divf %47, %48 : vector<2x128xf32>
    %cst_12 = arith.constant dense<0xFF800000> : vector<2x128xf32>
    %50 = vector.multi_reduction <maximumf>, %46, %cst_12 [1] : vector<2x8x128xf32> to vector<2x128xf32>
    %51 = tpu.iota {dimensions = array<i32: 1>} : vector<1x128xi32>
    %c0_13 = arith.constant 0 : index
    %52 = memref.load %arg5[%c0_13] : memref<1xf32, #tpu.memory_space<smem>>
    %53 = vector.broadcast %52 : f32 to vector<2x128xf32>
    %c3_i32 = arith.constant 3 : i32
    %54 = tpu.dynamic_rotate %49 by %c3_i32 dim 1 : vector<2x128xf32>, i32 -> vector<2x128xf32>
    %c3_i32_14 = arith.constant 3 : i32
    %55 = tpu.dynamic_rotate %50 by %c3_i32_14 dim 1 : vector<2x128xf32>, i32 -> vector<2x128xf32>
    %c3_i32_15 = arith.constant 3 : i32
    %56 = vector.broadcast %c3_i32_15 : i32 to vector<1x128xi32>
    %57 = arith.cmpi sge, %51, %56 : vector<1x128xi32>
    %c131_i32 = arith.constant 131 : i32
    %58 = vector.broadcast %c131_i32 : i32 to vector<1x128xi32>
    %59 = arith.cmpi slt, %51, %58 : vector<1x128xi32>
    %60 = arith.andi %57, %59 : vector<1x128xi1>
    %c0_16 = arith.constant 0 : index
    %c0_17 = arith.constant 0 : index
    %61 = memref.load %arg4[%c0_16, %c0_17] : memref<2x7xf32, #tpu.memory_space<smem>>
    %62 = vector.broadcast %61 : f32 to vector<2x128xf32>
    %63 = arith.mulf %62, %54 : vector<2x128xf32>
    %c1_18 = arith.constant 1 : index
    %c0_19 = arith.constant 0 : index
    %64 = memref.load %arg4[%c1_18, %c0_19] : memref<2x7xf32, #tpu.memory_space<smem>>
    %65 = vector.broadcast %64 : f32 to vector<2x128xf32>
    %66 = arith.mulf %65, %55 : vector<2x128xf32>
    %67 = arith.addf %63, %66 : vector<2x128xf32>
    %cst_20 = arith.constant 0.000000e+00 : f32
    %68 = vector.shape_cast %60 : vector<1x128xi1> to vector<1x128xi1>
    %69 = vector.broadcast %68 : vector<1x128xi1> to vector<2x128xi1>
    %70 = vector.broadcast %cst_20 : f32 to vector<2x128xf32>
    %71 = arith.select %69, %67, %70 : vector<2x128xi1>, vector<2x128xf32>
    %72 = arith.addf %53, %71 : vector<2x128xf32>
    %c2_i32 = arith.constant 2 : i32
    %73 = tpu.dynamic_rotate %49 by %c2_i32 dim 1 : vector<2x128xf32>, i32 -> vector<2x128xf32>
    %c2_i32_21 = arith.constant 2 : i32
    %74 = tpu.dynamic_rotate %50 by %c2_i32_21 dim 1 : vector<2x128xf32>, i32 -> vector<2x128xf32>
    %c2_i32_22 = arith.constant 2 : i32
    %75 = vector.broadcast %c2_i32_22 : i32 to vector<1x128xi32>
    %76 = arith.cmpi sge, %51, %75 : vector<1x128xi32>
    %c130_i32 = arith.constant 130 : i32
    %77 = vector.broadcast %c130_i32 : i32 to vector<1x128xi32>
    %78 = arith.cmpi slt, %51, %77 : vector<1x128xi32>
    %79 = arith.andi %76, %78 : vector<1x128xi1>
    %c0_23 = arith.constant 0 : index
    %c1_24 = arith.constant 1 : index
    %80 = memref.load %arg4[%c0_23, %c1_24] : memref<2x7xf32, #tpu.memory_space<smem>>
    %81 = vector.broadcast %80 : f32 to vector<2x128xf32>
    %82 = arith.mulf %81, %73 : vector<2x128xf32>
    %c1_25 = arith.constant 1 : index
    %c1_26 = arith.constant 1 : index
    %83 = memref.load %arg4[%c1_25, %c1_26] : memref<2x7xf32, #tpu.memory_space<smem>>
    %84 = vector.broadcast %83 : f32 to vector<2x128xf32>
    %85 = arith.mulf %84, %74 : vector<2x128xf32>
    %86 = arith.addf %82, %85 : vector<2x128xf32>
    %cst_27 = arith.constant 0.000000e+00 : f32
    %87 = vector.shape_cast %79 : vector<1x128xi1> to vector<1x128xi1>
    %88 = vector.broadcast %87 : vector<1x128xi1> to vector<2x128xi1>
    %89 = vector.broadcast %cst_27 : f32 to vector<2x128xf32>
    %90 = arith.select %88, %86, %89 : vector<2x128xi1>, vector<2x128xf32>
    %91 = arith.addf %72, %90 : vector<2x128xf32>
    %c1_i32_28 = arith.constant 1 : i32
    %92 = tpu.dynamic_rotate %49 by %c1_i32_28 dim 1 : vector<2x128xf32>, i32 -> vector<2x128xf32>
    %c1_i32_29 = arith.constant 1 : i32
    %93 = tpu.dynamic_rotate %50 by %c1_i32_29 dim 1 : vector<2x128xf32>, i32 -> vector<2x128xf32>
    %c1_i32_30 = arith.constant 1 : i32
    %94 = vector.broadcast %c1_i32_30 : i32 to vector<1x128xi32>
    %95 = arith.cmpi sge, %51, %94 : vector<1x128xi32>
    %c129_i32 = arith.constant 129 : i32
    %96 = vector.broadcast %c129_i32 : i32 to vector<1x128xi32>
    %97 = arith.cmpi slt, %51, %96 : vector<1x128xi32>
    %98 = arith.andi %95, %97 : vector<1x128xi1>
    %c0_31 = arith.constant 0 : index
    %c2_32 = arith.constant 2 : index
    %99 = memref.load %arg4[%c0_31, %c2_32] : memref<2x7xf32, #tpu.memory_space<smem>>
    %100 = vector.broadcast %99 : f32 to vector<2x128xf32>
    %101 = arith.mulf %100, %92 : vector<2x128xf32>
    %c1_33 = arith.constant 1 : index
    %c2_34 = arith.constant 2 : index
    %102 = memref.load %arg4[%c1_33, %c2_34] : memref<2x7xf32, #tpu.memory_space<smem>>
    %103 = vector.broadcast %102 : f32 to vector<2x128xf32>
    %104 = arith.mulf %103, %93 : vector<2x128xf32>
    %105 = arith.addf %101, %104 : vector<2x128xf32>
    %cst_35 = arith.constant 0.000000e+00 : f32
    %106 = vector.shape_cast %98 : vector<1x128xi1> to vector<1x128xi1>
    %107 = vector.broadcast %106 : vector<1x128xi1> to vector<2x128xi1>
    %108 = vector.broadcast %cst_35 : f32 to vector<2x128xf32>
    %109 = arith.select %107, %105, %108 : vector<2x128xi1>, vector<2x128xf32>
    %110 = arith.addf %91, %109 : vector<2x128xf32>
    %c0_36 = arith.constant 0 : index
    %c3 = arith.constant 3 : index
    %111 = memref.load %arg4[%c0_36, %c3] : memref<2x7xf32, #tpu.memory_space<smem>>
    %112 = vector.broadcast %111 : f32 to vector<2x128xf32>
    %113 = arith.mulf %112, %49 : vector<2x128xf32>
    %114 = arith.addf %110, %113 : vector<2x128xf32>
    %c1_37 = arith.constant 1 : index
    %c3_38 = arith.constant 3 : index
    %115 = memref.load %arg4[%c1_37, %c3_38] : memref<2x7xf32, #tpu.memory_space<smem>>
    %116 = vector.broadcast %115 : f32 to vector<2x128xf32>
    %117 = arith.mulf %116, %50 : vector<2x128xf32>
    %118 = arith.addf %114, %117 : vector<2x128xf32>
    %c127_i32 = arith.constant 127 : i32
    %119 = tpu.dynamic_rotate %49 by %c127_i32 dim 1 : vector<2x128xf32>, i32 -> vector<2x128xf32>
    %c127_i32_39 = arith.constant 127 : i32
    %120 = tpu.dynamic_rotate %50 by %c127_i32_39 dim 1 : vector<2x128xf32>, i32 -> vector<2x128xf32>
    %c-1_i32_40 = arith.constant -1 : i32
    %121 = vector.broadcast %c-1_i32_40 : i32 to vector<1x128xi32>
    %122 = arith.cmpi sge, %51, %121 : vector<1x128xi32>
    %c127_i32_41 = arith.constant 127 : i32
    %123 = vector.broadcast %c127_i32_41 : i32 to vector<1x128xi32>
    %124 = arith.cmpi slt, %51, %123 : vector<1x128xi32>
    %125 = arith.andi %122, %124 : vector<1x128xi1>
    %c0_42 = arith.constant 0 : index
    %c4 = arith.constant 4 : index
    %126 = memref.load %arg4[%c0_42, %c4] : memref<2x7xf32, #tpu.memory_space<smem>>
    %127 = vector.broadcast %126 : f32 to vector<2x128xf32>
    %128 = arith.mulf %127, %119 : vector<2x128xf32>
    %c1_43 = arith.constant 1 : index
    %c4_44 = arith.constant 4 : index
    %129 = memref.load %arg4[%c1_43, %c4_44] : memref<2x7xf32, #tpu.memory_space<smem>>
    %130 = vector.broadcast %129 : f32 to vector<2x128xf32>
    %131 = arith.mulf %130, %120 : vector<2x128xf32>
    %132 = arith.addf %128, %131 : vector<2x128xf32>
    %cst_45 = arith.constant 0.000000e+00 : f32
    %133 = vector.shape_cast %125 : vector<1x128xi1> to vector<1x128xi1>
    %134 = vector.broadcast %133 : vector<1x128xi1> to vector<2x128xi1>
    %135 = vector.broadcast %cst_45 : f32 to vector<2x128xf32>
    %136 = arith.select %134, %132, %135 : vector<2x128xi1>, vector<2x128xf32>
    %137 = arith.addf %118, %136 : vector<2x128xf32>
    %c126_i32 = arith.constant 126 : i32
    %138 = tpu.dynamic_rotate %49 by %c126_i32 dim 1 : vector<2x128xf32>, i32 -> vector<2x128xf32>
    %c126_i32_46 = arith.constant 126 : i32
    %139 = tpu.dynamic_rotate %50 by %c126_i32_46 dim 1 : vector<2x128xf32>, i32 -> vector<2x128xf32>
    %c-2_i32 = arith.constant -2 : i32
    %140 = vector.broadcast %c-2_i32 : i32 to vector<1x128xi32>
    %141 = arith.cmpi sge, %51, %140 : vector<1x128xi32>
    %c126_i32_47 = arith.constant 126 : i32
    %142 = vector.broadcast %c126_i32_47 : i32 to vector<1x128xi32>
    %143 = arith.cmpi slt, %51, %142 : vector<1x128xi32>
    %144 = arith.andi %141, %143 : vector<1x128xi1>
    %c0_48 = arith.constant 0 : index
    %c5 = arith.constant 5 : index
    %145 = memref.load %arg4[%c0_48, %c5] : memref<2x7xf32, #tpu.memory_space<smem>>
    %146 = vector.broadcast %145 : f32 to vector<2x128xf32>
    %147 = arith.mulf %146, %138 : vector<2x128xf32>
    %c1_49 = arith.constant 1 : index
    %c5_50 = arith.constant 5 : index
    %148 = memref.load %arg4[%c1_49, %c5_50] : memref<2x7xf32, #tpu.memory_space<smem>>
    %149 = vector.broadcast %148 : f32 to vector<2x128xf32>
    %150 = arith.mulf %149, %139 : vector<2x128xf32>
    %151 = arith.addf %147, %150 : vector<2x128xf32>
    %cst_51 = arith.constant 0.000000e+00 : f32
    %152 = vector.shape_cast %144 : vector<1x128xi1> to vector<1x128xi1>
    %153 = vector.broadcast %152 : vector<1x128xi1> to vector<2x128xi1>
    %154 = vector.broadcast %cst_51 : f32 to vector<2x128xf32>
    %155 = arith.select %153, %151, %154 : vector<2x128xi1>, vector<2x128xf32>
    %156 = arith.addf %137, %155 : vector<2x128xf32>
    %c125_i32 = arith.constant 125 : i32
    %157 = tpu.dynamic_rotate %49 by %c125_i32 dim 1 : vector<2x128xf32>, i32 -> vector<2x128xf32>
    %c125_i32_52 = arith.constant 125 : i32
    %158 = tpu.dynamic_rotate %50 by %c125_i32_52 dim 1 : vector<2x128xf32>, i32 -> vector<2x128xf32>
    %c-3_i32 = arith.constant -3 : i32
    %159 = vector.broadcast %c-3_i32 : i32 to vector<1x128xi32>
    %160 = arith.cmpi sge, %51, %159 : vector<1x128xi32>
    %c125_i32_53 = arith.constant 125 : i32
    %161 = vector.broadcast %c125_i32_53 : i32 to vector<1x128xi32>
    %162 = arith.cmpi slt, %51, %161 : vector<1x128xi32>
    %163 = arith.andi %160, %162 : vector<1x128xi1>
    %c0_54 = arith.constant 0 : index
    %c6 = arith.constant 6 : index
    %164 = memref.load %arg4[%c0_54, %c6] : memref<2x7xf32, #tpu.memory_space<smem>>
    %165 = vector.broadcast %164 : f32 to vector<2x128xf32>
    %166 = arith.mulf %165, %157 : vector<2x128xf32>
    %c1_55 = arith.constant 1 : index
    %c6_56 = arith.constant 6 : index
    %167 = memref.load %arg4[%c1_55, %c6_56] : memref<2x7xf32, #tpu.memory_space<smem>>
    %168 = vector.broadcast %167 : f32 to vector<2x128xf32>
    %169 = arith.mulf %168, %158 : vector<2x128xf32>
    %170 = arith.addf %166, %169 : vector<2x128xf32>
    %cst_57 = arith.constant 0.000000e+00 : f32
    %171 = vector.shape_cast %163 : vector<1x128xi1> to vector<1x128xi1>
    %172 = vector.broadcast %171 : vector<1x128xi1> to vector<2x128xi1>
    %173 = vector.broadcast %cst_57 : f32 to vector<2x128xf32>
    %174 = arith.select %172, %170, %173 : vector<2x128xi1>, vector<2x128xf32>
    %175 = arith.addf %156, %174 : vector<2x128xf32>
    %176 = arith.negf %175 : vector<2x128xf32>
    %177 = math.exp %176 : vector<2x128xf32>
    %cst_58 = arith.constant 1.000000e+00 : f32
    %178 = vector.broadcast %cst_58 : f32 to vector<2x128xf32>
    %179 = arith.addf %178, %177 : vector<2x128xf32>
    %180 = arith.divf %178, %179 : vector<2x128xf32>
    %181 = vector.shape_cast %180 : vector<2x128xf32> to vector<2x1x128xf32>
    %182 = vector.broadcast %181 : vector<2x1x128xf32> to vector<2x8x128xf32>
    %183 = arith.mulf %46, %182 : vector<2x8x128xf32>
    %c0_59 = arith.constant 0 : index
    %c0_60 = arith.constant 0 : index
    %c0_61 = arith.constant 0 : index
    %184 = vector.load %arg6[%c0_59, %c0_60, %c0_61] : memref<2x8x128xf32, #tpu.memory_space<vmem>>, vector<2x8x128xf32>
    tpu.vector_store %arg6[%c0_59, %c0_60, %c0_61], %183 {strides = array<i32>} : memref<2x8x128xf32, #tpu.memory_space<vmem>>, vector<2x8x128xf32>,
    return
  }
  func.func @transform_0(%arg0: i32) -> (i32, i32, i32) {
    %c0_i32 = arith.constant 0 : i32
    %c0_i32_0 = arith.constant 0 : i32
    %c0_i32_1 = arith.constant 0 : i32
    return %arg0, %c0_i32, %c0_i32_0 : i32, i32, i32
  }
  func.func @transform_1(%arg0: i32) -> i32 {
    %c0_i32 = arith.constant 0 : i32
    %c0_i32_0 = arith.constant 0 : i32
    return %c0_i32 : i32
  }
  func.func @transform_2(%arg0: i32) -> i32 {
    %c0_i32 = arith.constant 0 : i32
    %c0_i32_0 = arith.constant 0 : i32
    return %c0_i32 : i32
  }
  func.func @transform_3(%arg0: i32) -> (i32, i32) {
    %c0_i32 = arith.constant 0 : i32
    %c0_i32_0 = arith.constant 0 : i32
    %c0_i32_1 = arith.constant 0 : i32
    return %c0_i32, %c0_i32_0 : i32, i32
  }
  func.func @transform_4(%arg0: i32) -> i32 {
    %c0_i32 = arith.constant 0 : i32
    %c0_i32_0 = arith.constant 0 : i32
    return %c0_i32 : i32
  }
  func.func @transform_5(%arg0: i32) -> (i32, i32, i32) {
    %c0_i32 = arith.constant 0 : i32
    %c0_i32_0 = arith.constant 0 : i32
    %c0_i32_1 = arith.constant 0 : i32
    return %arg0, %c0_i32, %c0_i32_0 : i32, i32, i32
  }
}

</mosaic_0001>

<llo_original>
// kernel: tpu_custom_call.1
$region0: #{tpu_custom_call.1}
  #allocation0 [shape = 'u32[]', space=smem, size = 0x4, offset = 0x4, fixed_abs, tag = 'smem constant byte address 0x4 - core index']
  #allocation1 [shape = 'u32[144,128]{1,0:T(1,128)}', space=vmem, size = 0x12000, scoped, tag = 'internal scratch']
  #allocation2 [shape = 'f32[1]{0:T(128)S(6)}', space=smem, size = 0x200, scoped, tag = 'scoped memory for tpu_custom_call.1']
  #allocation3 [shape = 'f32[1]{0:T(128)S(6)}', space=smem, size = 0x200, scoped, tag = 'scoped memory for tpu_custom_call.1']
  %s0 = inlined_call_operand.hbm [shape: f32[2,8,128], index: 0, kind: input, shape index: {}]
  %s1 = inlined_call_operand.vmem [shape: f32[3], index: 1, kind: input, shape index: {}]
  %s2 = inlined_call_operand.<no memory space> [shape: f32[1], index: 2, kind: input, shape index: {}]
  %s3 = inlined_call_operand.vmem [shape: f32[2,7], index: 3, kind: input, shape index: {}]
  %s4 = inlined_call_operand.<no memory space> [shape: f32[1], index: 4, kind: input, shape index: {}]
  %s5 = inlined_call_operand.hbm [shape: f32[2,8,128], index: 5, kind: output, shape index: {}]
  %s6 = sld [smem:[#allocation0]]
  $region42: #{tpu_custom_call.1} parent=0
    _
  %s8 = ssub.s32 1, %s6
  %s9 = scalar_select 0, %s8, %s6
  %10 = sst [smem:[#allocation2]] %s2
  %11 = sst [smem:[#allocation3]] %s4
  $region1: #{tpu_custom_call.1} parent=0
    #allocation4 [shape = 'u8[8192]{0}', space=vmem, size = 0x2000, scoped, tag = 'input window, operand 0, single buffered']
    #allocation5 [shape = 's32[1]{0}', space=sflag, size = 0x4, scoped, tag = 'scoped memory for tpu_custom_call.1']
    #allocation6 [shape = 's32[1]{0}', space=sflag, size = 0x4, scoped, tag = 'scoped memory for tpu_custom_call.1']
    #allocation7 [shape = 's32[1]{0}', space=sflag, size = 0x4, scoped, tag = 'scoped memory for tpu_custom_call.1']
    #allocation8 [shape = 'u8[512]{0}', space=smem, size = 0x200, scoped, tag = 'input window, operand 1, single buffered']
    #allocation9 [shape = 'u8[1024]{0}', space=smem, size = 0x400, scoped, tag = 'input window, operand 3, single buffered']
    #allocation10 [shape = 's32[1]{0}', space=sflag, size = 0x4, scoped, tag = 'scoped memory for tpu_custom_call.1']
    #allocation11 [shape = 'u8[8192]{0}', space=vmem, size = 0x2000, scoped, tag = 'output window, operand 0, single buffered']
    %12 = vsyncpa [#allocation5], 0
    %13 = vsyncpa [#allocation7], 0
    %14 = vsyncpa [#allocation10], 0
    %15 = vsyncpa [#allocation6], 0
    // Predicated region
    $region2: #{tpu_custom_call.1} parent=1 // pred_check
      _
    $region3: #{tpu_custom_call.1} parent=1 // pred_check_branch
      %17 = sbr.rel (0) target = $region5
    $region4: #{tpu_custom_call.1} parent=1 // pred_region
      %s19 = ssub.s32 256, 256
      %20 = vsyncadd [#allocation5], %s19
      %s21 = sshll.u32 [#allocation4], 4
      %s22 = int_to_ptr.vmem [resolvable:$true] %s21
      %27 = dma.hbm_to_vmem [thread:$0]  %s0, 256, %s22, [#allocation5], 128, 128, 8
    $region5: #{tpu_custom_call.1} parent=1 // pred_fallthru
      _
    // Predicated region
    $region6: #{tpu_custom_call.1} parent=1 // pred_check
      _
    $region7: #{tpu_custom_call.1} parent=1 // pred_check_branch
      %29 = sbr.rel (0) target = $region9
    $region8: #{tpu_custom_call.1} parent=1 // pred_region
      %s31 = ssub.s32 16, 16
      %32 = vsyncadd [#allocation7], %s31
      %s34 = sshll.u32 %s1, 4
      %s35 = int_to_ptr.vmem [resolvable:$true] %s34
      %37 = dma.vmem_to_smem %s35, 16, [#allocation8], [#allocation7]
    $region9: #{tpu_custom_call.1} parent=1 // pred_fallthru
      _
    // Predicated region
    $region10: #{tpu_custom_call.1} parent=1 // pred_check
      _
    $region11: #{tpu_custom_call.1} parent=1 // pred_check_branch
      %39 = sbr.rel (0) target = $region13
    $region12: #{tpu_custom_call.1} parent=1 // pred_region
      _
    $region13: #{tpu_custom_call.1} parent=1 // pred_fallthru
      _
    // Predicated region
    $region14: #{tpu_custom_call.1} parent=1 // pred_check
      _
    $region15: #{tpu_custom_call.1} parent=1 // pred_check_branch
      %41 = sbr.rel (0) target = $region17
    $region16: #{tpu_custom_call.1} parent=1 // pred_region
      %s43 = ssub.s32 32, 32
      %44 = vsyncadd [#allocation10], %s43
      %s46 = sshll.u32 %s3, 4
      %s47 = int_to_ptr.vmem [resolvable:$true] %s46
      %49 = dma.vmem_to_smem %s47, 32, [#allocation9], [#allocation10]
    $region17: #{tpu_custom_call.1} parent=1 // pred_fallthru
      _
    // Predicated region
    $region18: #{tpu_custom_call.1} parent=1 // pred_check
      _
    $region19: #{tpu_custom_call.1} parent=1 // pred_check_branch
      %51 = sbr.rel (0) target = $region21
    $region20: #{tpu_custom_call.1} parent=1 // pred_region
      _
    $region21: #{tpu_custom_call.1} parent=1 // pred_fallthru
      _
    // Predicated region
    $region22: #{tpu_custom_call.1} parent=1 // pred_check
      _
    $region23: #{tpu_custom_call.1} parent=1 // pred_check_branch
      %53 = sbr.rel (0) target = $region25
    $region24: #{tpu_custom_call.1} parent=1 // pred_region
      %54 = dma.done [#allocation5], 256
    $region25: #{tpu_custom_call.1} parent=1 // pred_fallthru
      _
    // Predicated region
    $region26: #{tpu_custom_call.1} parent=1 // pred_check
      _
    $region27: #{tpu_custom_call.1} parent=1 // pred_check_branch
      %56 = sbr.rel (0) target = $region29
    $region28: #{tpu_custom_call.1} parent=1 // pred_region
      %57 = dma.done [#allocation7], 16
    $region29: #{tpu_custom_call.1} parent=1 // pred_fallthru
      _
    // Predicated region
    $region30: #{tpu_custom_call.1} parent=1 // pred_check
      _
    $region31: #{tpu_custom_call.1} parent=1 // pred_check_branch
      %59 = sbr.rel (0) target = $region33
    $region32: #{tpu_custom_call.1} parent=1 // pred_region
      %60 = dma.done [#allocation10], 32
    $region33: #{tpu_custom_call.1} parent=1 // pred_fallthru
      _
    %61 = sfence
    %v62 = vld [vmem:[#allocation4] sm:$0xff]
    %v63 = vld [vmem:[#allocation4 + $0x8] sm:$0xff]
    %64 = vadd.xlane.f32.xlu0 %v62
    %v65 = vpop.xlane.xlu0 %64
    %66 = vadd.xlane.f32.xlu0 %v63
    %v67 = vpop.xlane.xlu0 %66
    %v68 = vrcp.pop 128.0
    %v69 = vmul.f32 %v65, %v68
    %v70 = vmul.f32 %v67, %v68
    %v71 = vlaneseq
    %v72 = vand.u32 %v71, 127
    %s73 = sld [smem:[#allocation2]]
    %v74 = vstv %s73
    %v77 = vlaneseq
    %v78 = vshrl.u32 %v77, 7
    %v79 = vsub.s32 %v72, %v78
    %v80 = vrot.slane %v69, %v79
    %v81 = vlaneseq
    %v82 = vshrl.u32 %v81, 7
    %v83 = vsub.s32 %v72, %v82
    %v84 = vrot.slane %v70, %v83
    %vm85 = vcmask 1041409
    %v86 = vsel %vm85, %v84, %v80
    %vm88 = vcmask 1047616
    %89 = vrot.lane.b32.xlu0 %v86, 8
    %v90 = vpop.permute.xlu0 %89
    %v91 = vsel %vm88, %v90, %v86
    %92 = vrot.lane.b32.xlu0 %v91, 8
    %v93 = vpop.permute.xlu0 %92
    %v94 = vsel %vm88, %v93, %v86
    %vm95 = vcmp.ge.s32.totalorder %v72, 1
    %vm96 = vcmp.lt.s32.totalorder %v72, 9
    %vm97 = vmand %vm95, %vm96
    %s98 = sld [smem:[#allocation8]]
    %v99 = vstv %s98
    %v100 = vmul.f32 %v99, %v94
    %v101 = vsel %vm97, 1, 0
    %vm102 = vcmp.eq.s32.totalorder %v101, 1
    %104 = vrot.lane.b32.xlu0 %v100, 121
    %v105 = vpop.permute.xlu0 %104
    %v107 = vsel %vm102, %v105, 0.0
    %v108 = vadd.f32 %v74, %v107
    %s109 = sld [smem:[#allocation8 + $0x1]]
    %v110 = vstv %s109
    %v111 = vmul.f32 %v110, %v69
    %v112 = vmul.f32 %v110, %v70
    %v115 = vlaneseq
    %v116 = vshrl.u32 %v115, 7
    %v117 = vsub.s32 %v72, %v116
    %v118 = vrot.slane %v111, %v117
    %v119 = vlaneseq
    %v120 = vshrl.u32 %v119, 7
    %v121 = vsub.s32 %v72, %v120
    %v122 = vrot.slane %v112, %v121
    %v123 = vsel %vm85, %v122, %v118
    %v125 = vadd.f32 %v108, %v123
    %vm126 = vcmp.ge.s32.totalorder %v72, 4294967295
    %vm127 = vcmp.lt.s32.totalorder %v72, 7
    %vm128 = vmand %vm126, %vm127
    %s129 = sld [smem:[#allocation8 + $0x2]]
    %v130 = vstv %s129
    %v131 = vmul.f32 %v130, %v94
    %v132 = vsel %vm128, 1, 0
    %vm133 = vcmp.eq.s32.totalorder %v132, 1
    %135 = vrot.lane.b32.xlu0 %v131, 127
    %v136 = vpop.permute.xlu0 %135
    %v138 = vsel %vm133, %v136, 0.0
    %v139 = vadd.f32 %v125, %v138
    %v140 = vxor.u32 %v139, 2147483648
    %v141 = vmul.f32 %v140, 1.442695
    %v142 = vpow.pop %v141
    %v143 = vadd.f32 %v142, 1.0
    %v144 = vrcp.pop %v143
    %v145 = vmul.f32 1.0, %v144
    %v146 = vlaneseq
    %v147 = vshrl.u32 %v146, 7
    %v148 = vsub.s32 0, %v147
    %v149 = vrot.slane %v145, %v148
    %151 = vbcast.lane.b32.xlu0 %v149, 256
    %v152 = vpop.permute.xlu0 %151
    %v153 = vlaneseq
    %v154 = vshrl.u32 %v153, 7
    %v155 = vsub.s32 1, %v154
    %v156 = vrot.slane %v145, %v155
    %158 = vbcast.lane.b32.xlu0 %v156, 256
    %v159 = vpop.permute.xlu0 %158
    %v160 = vmul.f32 %v62, %v152
    %v161 = vmul.f32 %v63, %v159
    %v162 = vrot.slane %v160, 4
    %v163 = vadd.f32 %v160, %v162
    %v164 = vrot.slane %v163, 2
    %v165 = vadd.f32 %v163, %v164
    %v166 = vrot.slane %v165, 1
    %v167 = vadd.f32 %v165, %v166
    %v168 = vrot.slane %v161, 4
    %v169 = vadd.f32 %v161, %v168
    %v170 = vrot.slane %v169, 2
    %v171 = vadd.f32 %v169, %v170
    %v172 = vrot.slane %v171, 1
    %v173 = vadd.f32 %v171, %v172
    %v174 = vrcp.pop 8.0
    %v175 = vmul.f32 %v167, %v174
    %v176 = vmul.f32 %v173, %v174
    %v177 = vrot.slane %v160, 4
    %v178 = vmax.f32 %v160, %v177
    %v179 = vrot.slane %v178, 2
    %v180 = vmax.f32 %v178, %v179
    %v181 = vrot.slane %v180, 1
    %v182 = vmax.f32 %v180, %v181
    %v183 = vrot.slane %v161, 4
    %v184 = vmax.f32 %v161, %v183
    %v185 = vrot.slane %v184, 2
    %v186 = vmax.f32 %v184, %v185
    %v187 = vrot.slane %v186, 1
    %v188 = vmax.f32 %v186, %v187
    %s189 = sld [smem:[#allocation3]]
    %v190 = vstv %s189
    %v193 = vsel %vm85, %v176, %v175
    %195 = vrot.lane.b32.xlu0 %v193, 3
    %v196 = vpop.permute.xlu0 %195
    %v199 = vsel %vm85, %v188, %v182
    %201 = vrot.lane.b32.xlu0 %v199, 3
    %v202 = vpop.permute.xlu0 %201
    %vm203 = vcmp.ge.s32.totalorder %v72, 3
    %vm204 = vcmp.lt.s32.totalorder %v72, 131
    %vm205 = vmand %vm203, %vm204
    %s206 = sld [smem:[#allocation9]]
    %v207 = vstv %s206
    %v208 = vmul.f32 %v207, %v196
    %s209 = sld [smem:[#allocation9 + $0x80]]
    %v210 = vstv %s209
    %v211 = vmul.f32 %v210, %v202
    %v212 = vadd.f32 %v208, %v211
    %v213 = vsel %vm205, 1, 0
    %vm214 = vcmp.eq.s32.totalorder %v213, 1
    %v215 = vsel %vm214, %v212, 0.0
    %v216 = vadd.f32 %v190, %v215
    %217 = vrot.lane.b32.xlu0 %v193, 2
    %v218 = vpop.permute.xlu0 %217
    %219 = vrot.lane.b32.xlu0 %v199, 2
    %v220 = vpop.permute.xlu0 %219
    %vm221 = vcmp.ge.s32.totalorder %v72, 2
    %vm222 = vcmp.lt.s32.totalorder %v72, 130
    %vm223 = vmand %vm221, %vm222
    %s224 = sld [smem:[#allocation9 + $0x1]]
    %v225 = vstv %s224
    %v226 = vmul.f32 %v225, %v218
    %s227 = sld [smem:[#allocation9 + $0x81]]
    %v228 = vstv %s227
    %v229 = vmul.f32 %v228, %v220
    %v230 = vadd.f32 %v226, %v229
    %v231 = vsel %vm223, 1, 0
    %vm232 = vcmp.eq.s32.totalorder %v231, 1
    %v233 = vsel %vm232, %v230, 0.0
    %v234 = vadd.f32 %v216, %v233
    %235 = vrot.lane.b32.xlu0 %v193, 1
    %v236 = vpop.permute.xlu0 %235
    %237 = vrot.lane.b32.xlu0 %v199, 1
    %v238 = vpop.permute.xlu0 %237
    %vm239 = vcmp.lt.s32.totalorder %v72, 129
    %vm240 = vmand %vm95, %vm239
    %s241 = sld [smem:[#allocation9 + $0x2]]
    %v242 = vstv %s241
    %v243 = vmul.f32 %v242, %v236
    %s244 = sld [smem:[#allocation9 + $0x82]]
    %v245 = vstv %s244
    %v246 = vmul.f32 %v245, %v238
    %v247 = vadd.f32 %v243, %v246
    %v248 = vsel %vm240, 1, 0
    %vm249 = vcmp.eq.s32.totalorder %v248, 1
    %v250 = vsel %vm249, %v247, 0.0
    %v251 = vadd.f32 %v234, %v250
    %s252 = sld [smem:[#allocation9 + $0x3]]
    %v253 = vstv %s252
    %v254 = vmul.f32 %v253, %v175
    %v255 = vmul.f32 %v253, %v176
    %v258 = vsel %vm85, %v255, %v254
    %v260 = vadd.f32 %v251, %v258
    %s261 = sld [smem:[#allocation9 + $0x83]]
    %v262 = vstv %s261
    %v263 = vmul.f32 %v262, %v182
    %v264 = vmul.f32 %v262, %v188
    %v267 = vsel %vm85, %v264, %v263
    %v269 = vadd.f32 %v260, %v267
    %270 = vrot.lane.b32.xlu0 %v193, 127
    %v271 = vpop.permute.xlu0 %270
    %272 = vrot.lane.b32.xlu0 %v199, 127
    %v273 = vpop.permute.xlu0 %272
    %vm274 = vcmp.lt.s32.totalorder %v72, 127
    %vm275 = vmand %vm126, %vm274
    %s276 = sld [smem:[#allocation9 + $0x4]]
    %v277 = vstv %s276
    %v278 = vmul.f32 %v277, %v271
    %s279 = sld [smem:[#allocation9 + $0x84]]
    %v280 = vstv %s279
    %v281 = vmul.f32 %v280, %v273
    %v282 = vadd.f32 %v278, %v281
    %v283 = vsel %vm275, 1, 0
    %vm284 = vcmp.eq.s32.totalorder %v283, 1
    %v285 = vsel %vm284, %v282, 0.0
    %v286 = vadd.f32 %v269, %v285
    %287 = vrot.lane.b32.xlu0 %v193, 126
    %v288 = vpop.permute.xlu0 %287
    %289 = vrot.lane.b32.xlu0 %v199, 126
    %v290 = vpop.permute.xlu0 %289
    %vm291 = vcmp.ge.s32.totalorder %v72, 4294967294
    %vm292 = vcmp.lt.s32.totalorder %v72, 126
    %vm293 = vmand %vm291, %vm292
    %s294 = sld [smem:[#allocation9 + $0x5]]
    %v295 = vstv %s294
    %v296 = vmul.f32 %v295, %v288
    %s297 = sld [smem:[#allocation9 + $0x85]]
    %v298 = vstv %s297
    %v299 = vmul.f32 %v298, %v290
    %v300 = vadd.f32 %v296, %v299
    %v301 = vsel %vm293, 1, 0
    %vm302 = vcmp.eq.s32.totalorder %v301, 1
    %v303 = vsel %vm302, %v300, 0.0
    %v304 = vadd.f32 %v286, %v303
    %305 = vrot.lane.b32.xlu0 %v193, 125
    %v306 = vpop.permute.xlu0 %305
    %307 = vrot.lane.b32.xlu0 %v199, 125
    %v308 = vpop.permute.xlu0 %307
    %vm309 = vcmp.ge.s32.totalorder %v72, 4294967293
    %vm310 = vcmp.lt.s32.totalorder %v72, 125
    %vm311 = vmand %vm309, %vm310
    %s312 = sld [smem:[#allocation9 + $0x6]]
    %v313 = vstv %s312
    %v314 = vmul.f32 %v313, %v306
    %s315 = sld [smem:[#allocation9 + $0x86]]
    %v316 = vstv %s315
    %v317 = vmul.f32 %v316, %v308
    %v318 = vadd.f32 %v314, %v317
    %v319 = vsel %vm311, 1, 0
    %vm320 = vcmp.eq.s32.totalorder %v319, 1
    %v321 = vsel %vm320, %v318, 0.0
    %v322 = vadd.f32 %v304, %v321
    %v323 = vxor.u32 %v322, 2147483648
    %v324 = vmul.f32 %v323, 1.442695
    %v325 = vpow.pop %v324
    %v326 = vadd.f32 %v325, 1.0
    %v327 = vrcp.pop %v326
    %v328 = vmul.f32 1.0, %v327
    %v331 = vunpack.c.l.s4 1966171168
    %v332 = vunpack.c.0.s8 %v331
    %v333 = vlaneseq
    %v334 = vshrl.u32 %v333, 7
    %v335 = vsub.s32 %v332, %v334
    %v336 = vrot.slane %v328, %v335
    %v337 = vcombine.high %v336, %v336
    %v339 = vunpack.c.l.s4 1966171168
    %v340 = vunpack.c.0.s8 %v339
    %v341 = vlaneseq
    %v342 = vshrl.u32 %v341, 7
    %v343 = vsub.s32 %v340, %v342
    %v344 = vrot.slane %v336, %v343
    %v346 = vunpack.c.l.s4 1966171168
    %v347 = vunpack.c.0.s8 %v346
    %v348 = vlaneseq
    %v349 = vshrl.u32 %v348, 7
    %v350 = vsub.s32 %v347, %v349
    %v351 = vrot.slane %v337, %v350
    %v352 = vlaneseq
    %v353 = vshrl.u32 %v352, 7
    %v354 = vsub.s32 0, %v353
    %v355 = vrot.slane %v344, %v354
    %v356 = vlaneseq
    %v357 = vshrl.u32 %v356, 7
    %v358 = vsub.s32 0, %v357
    %v359 = vrot.slane %v351, %v358
    %v362 = vmul.f32 %v160, %v355
    %v363 = vmul.f32 %v161, %v359
    %364 = vst [vmem:[#allocation11] sm:$0xff] %v362
    %365 = vst [vmem:[#allocation11 + $0x8] sm:$0xff] %v363
    // Predicated region
    $region34: #{tpu_custom_call.1} parent=1 // pred_check
      _
    $region35: #{tpu_custom_call.1} parent=1 // pred_check_branch
      %367 = sbr.rel (0) target = $region37
    $region36: #{tpu_custom_call.1} parent=1 // pred_region
      %s369 = ssub.s32 256, 256
      %370 = vsyncadd [#allocation6], %s369
      %s371 = sshll.u32 [#allocation11], 4
      %s372 = int_to_ptr.vmem [resolvable:$true] %s371
      %377 = dma.vmem_to_hbm [thread:$0]  %s372, 256, %s5, [#allocation6], 128, 128, 8
    $region37: #{tpu_custom_call.1} parent=1 // pred_fallthru
      _
    // Predicated region
    $region38: #{tpu_custom_call.1} parent=1 // pred_check
      _
    $region39: #{tpu_custom_call.1} parent=1 // pred_check_branch
      %379 = sbr.rel (0) target = $region41
    $region40: #{tpu_custom_call.1} parent=1 // pred_region
      %380 = dma.done [#allocation6], 256
    $region41: #{tpu_custom_call.1} parent=1 // pred_fallthru
      _
    %381 = vsyncpa [#allocation5], 1
    %382 = vsyncpa [#allocation6], 1
    %383 = vsyncpa [#allocation7], 1
    %384 = vsyncpa [#allocation10], 1

</llo_original>
